<compile_context>
chip_gen: v7x
topology: tpu7x:2x2x1
jax: 0.10.0
libtpu: 0.0.40
codegen_flags: <defaults>
</compile_context>

<pallas_src>
import jax
import jax.numpy as jnp
from jax.experimental import pallas as pl
from jax.experimental.pallas import tpu as pltpu

_LANES = 128
_SUBLANES = 8
_NUM_CORE_SPLITS = 2          # explicit 2-way spatial split (v7x megacore)


def _vmem_budget_bytes() -> int:
    """Per-generation VMEM budget: 3/4 of physical, capped at 96 MiB.
    v7x (64 MiB) -> 48 MiB; v6e / v5e (128 MiB) -> 96 MiB."""
    cap = 128 * 1024 * 1024
    try:
        info = pltpu.get_tpu_info()
        cap = int(getattr(info, "vmem_capacity_bytes", cap))
    except Exception:
        pass
    return min((cap * 3) // 4, 96 * 1024 * 1024)


def _compute_mask(uv_vals, segm_vals, intersection: bool):
    uv_mask = (uv_vals > -1.0).astype(jnp.float32)          # (1,1,tr,128)
    segm = segm_vals.astype(jnp.float32)                    # (1,1,tr,128)
    if intersection:
        return uv_mask * segm
    return jnp.clip(uv_mask + segm, 0.0, 1.0)


def _make_single_tile_kernel(intersection: bool, scale: float):
    """Fast path: whole per-batch spatial slab in one grid step, no scratch."""
    def kernel(fake_ref, real_ref, uv_ref, segm_ref, out_ref):
        mask = _compute_mask(uv_ref[...], segm_ref[...], intersection)
        diff = (real_ref[...].astype(jnp.float32)
                - fake_ref[...].astype(jnp.float32)) * mask
        s = jnp.sum(diff * diff) * jnp.float32(scale)
        out_ref[...] = jnp.full(out_ref.shape, s, dtype=jnp.float32)
    return kernel


def _make_tiled_kernel(intersection: bool, scale: float, tiles_per_split: int,
                       tile_rows: int, rows: int, need_row_mask: bool):
    """grid = (core split [parallel], batch [parallel], spatial tile [reduce])."""
    def kernel(fake_ref, real_ref, uv_ref, segm_ref, out_ref, acc_ref):
        t = pl.program_id(2)

        @pl.when(t == 0)
        def _():
            acc_ref[...] = jnp.zeros_like(acc_ref)

        mask = _compute_mask(uv_ref[...], segm_ref[...], intersection)
        diff = (real_ref[...].astype(jnp.float32)
                - fake_ref[...].astype(jnp.float32)) * mask   # (1,C,tr,128)
        sq = diff * diff

        if need_row_mask:
            # Zero rows past the real extent (partial trailing tile and the
            # clamped over-provisioned tiles of the last core split).
            s_id = pl.program_id(0)
            row0 = (s_id * tiles_per_split + t) * tile_rows
            row_idx = row0 + jax.lax.broadcasted_iota(
                jnp.int32, (1, 1, tile_rows, _LANES), 2)
            sq = jnp.where(row_idx < rows, sq, 0.0)

        # Fold the whole tile into one vreg: pure elementwise VPU adds, no XLU,
        # and only a single small (8,128) accumulator read-modify-write.
        partial = jnp.sum(sq.reshape(-1, _SUBLANES, _LANES), axis=0)
        acc_ref[...] += partial

        @pl.when(t == tiles_per_split - 1)
        def _():
            # One single-vreg cross-lane reduce per (split, batch).
            s = jnp.sum(acc_ref[...]) * jnp.float32(scale)
            out_ref[...] = jnp.full(out_ref.shape, s, dtype=jnp.float32)
    return kernel


def l2_loss_pallas(fake_rgb, real_rgb, uv, real_segm,
                   weight: float = 1.0, intersection: bool = False,
                   max_tile_rows: int | None = None):
    """Pallas implementation of L2Loss.forward. Returns a scalar float32 loss."""
    B, C, H, W = fake_rgb.shape
    assert real_rgb.shape == (B, C, H, W)
    assert uv.shape[0] == B and uv.shape[2:] == (H, W)
    assert real_segm.shape == (B, 1, H, W)

    HW = H * W
    rows = pl.cdiv(HW, _LANES)
    HW_pad = rows * _LANES

    def prep(x):
        ch = x.shape[1]
        if HW_pad == HW:
            return x.reshape(B, ch, rows, _LANES)          # free reshape
        # TODO(synk): ragged H*W (not a multiple of 128) still needs a padded
        # copy to reach the lane-dense layout; fake/real pad with zeros so the
        # padded pixels contribute exactly 0 to the squared error.
        x = x.reshape(B, ch, HW)
        x = jnp.pad(x, ((0, 0), (0, 0), (0, HW_pad - HW)))
        return x.reshape(B, ch, rows, _LANES)

    fake_p = prep(fake_rgb)
    real_p = prep(real_rgb)
    uv_p = prep(uv if HW_pad == HW else uv[:, 0:1])   # BlockSpec DMAs ch 0 only
    segm_p = prep(real_segm)

    isz = lambda a: jnp.dtype(a.dtype).itemsize
    per_row_bytes = _LANES * (C * (isz(fake_rgb) + isz(real_rgb))
                              + isz(uv) + isz(real_segm))
    vmem_budget = _vmem_budget_bytes()
    if max_tile_rows is None:
        # Double-buffered input windows get ~80% of the budget.
        max_tile_rows = int(vmem_budget * 0.8) // (2 * per_row_bytes)
    max_tile_rows = max(_SUBLANES, (max_tile_rows // _SUBLANES) * _SUBLANES)

    # MSE mean is over the *original* element count; padding adds zeros only.
    scale = float(weight) / float(B * C * H * W)

    def cparams(sem):
        return pltpu.CompilerParams(dimension_semantics=sem,
                                    vmem_limit_bytes=int(vmem_budget))

    # ---------------- single-tile fast path ----------------
    if rows <= max_tile_rows:
        kernel = _make_single_tile_kernel(intersection, scale)
        data_spec = pl.BlockSpec((1, C, rows, _LANES), lambda b: (b, 0, 0, 0))
        mask_spec = pl.BlockSpec((1, 1, rows, _LANES), lambda b: (b, 0, 0, 0))
        cost = pl.CostEstimate(
            flops=6 * B * C * rows * _LANES, transcendentals=0,
            bytes_accessed=int(B * rows * per_row_bytes
                               + 4 * B * _SUBLANES * _LANES))
        out = pl.pallas_call(
            kernel,
            out_shape=jax.ShapeDtypeStruct((B, _SUBLANES, _LANES), jnp.float32),
            grid_spec=pltpu.PrefetchScalarGridSpec(
                num_scalar_prefetch=0,
                grid=(B,),
                in_specs=[data_spec, data_spec, mask_spec, mask_spec],
                out_specs=pl.BlockSpec((1, _SUBLANES, _LANES),
                                       lambda b: (b, 0, 0)),
                scratch_shapes=[]),
            compiler_params=cparams(("parallel",)),
            cost_estimate=cost,
        )(fake_p, real_p, uv_p, segm_p)
        return jnp.sum(out[:, 0, 0])

    # ---------------- tiled reduction with 2-way core split ----------------
    tile_rows = max_tile_rows
    num_tiles = pl.cdiv(rows, tile_rows)
    num_splits = _NUM_CORE_SPLITS
    tiles_per_split = pl.cdiv(num_tiles, num_splits)
    covered_rows = num_splits * tiles_per_split * tile_rows
    need_row_mask = covered_rows != rows

    def tile_idx(s, t):
        # Clamp so over-provisioned tiles (odd num_tiles / partial trailing
        # tile) never index past the array; their rows are zeroed in-kernel.
        return jnp.minimum(s * tiles_per_split + t, num_tiles - 1)

    data_spec = pl.BlockSpec((1, C, tile_rows, _LANES),
                             lambda s, b, t: (b, 0, tile_idx(s, t), 0))
    mask_spec = pl.BlockSpec((1, 1, tile_rows, _LANES),
                             lambda s, b, t: (b, 0, tile_idx(s, t), 0))

    kernel = _make_tiled_kernel(intersection, scale, tiles_per_split,
                                tile_rows, rows, need_row_mask)
    cost = pl.CostEstimate(
        flops=7 * B * C * covered_rows * _LANES, transcendentals=0,
        bytes_accessed=int(B * covered_rows * per_row_bytes
                           + 4 * num_splits * B * _SUBLANES * _LANES))
    out = pl.pallas_call(
        kernel,
        out_shape=jax.ShapeDtypeStruct((num_splits, B, _SUBLANES, _LANES),
                                       jnp.float32),
        grid_spec=pltpu.PrefetchScalarGridSpec(
            num_scalar_prefetch=0,
            grid=(num_splits, B, tiles_per_split),
            in_specs=[data_spec, data_spec, mask_spec, mask_spec],
            out_specs=pl.BlockSpec((1, 1, _SUBLANES, _LANES),
                                   lambda s, b, t: (s, b, 0, 0)),
            scratch_shapes=[pltpu.VMEM((_SUBLANES, _LANES), jnp.float32)]),
        compiler_params=cparams(("parallel", "parallel", "arbitrary")),
        cost_estimate=cost,
    )(fake_p, real_p, uv_p, segm_p)

    # Per-(split, batch) scaled partial sums; final tiny sum in the wrapper.
    return jnp.sum(out[:, :, 0, 0])


def _l2_loss_ref(fake_rgb, real_rgb, uv, real_segm,
                 weight: float = 1.0, intersection: bool = False):
    """Pure-JAX reference for correctness checking."""
    uv_mask = (uv[:, 0:1] > -1.0).astype(jnp.float32)
    if intersection:
        mask = uv_mask * real_segm
    else:
        mask = jnp.clip(uv_mask + real_segm, 0.0, 1.0)
    diff = (real_rgb * mask) - (fake_rgb * mask)
    return jnp.mean(diff * diff) * weight


def _make_inputs(key, B, C, H, W):
    k1, k2, k3, k4, k5 = jax.random.split(key, 5)
    fake_rgb = jax.random.normal(k1, (B, C, H, W), dtype=jnp.float32)
    real_rgb = jax.random.normal(k2, (B, C, H, W), dtype=jnp.float32)
    uv_raw = jax.random.uniform(k3, (B, 2, H, W), minval=-1.0, maxval=1.0)
    invalid = jax.random.uniform(k4, (B, 1, H, W)) < 0.5
    uv = jnp.where(invalid, -1.0, uv_raw)
    real_segm = (jax.random.uniform(k5, (B, 1, H, W)) > 0.5).astype(jnp.float32)
    return fake_rgb, real_rgb, uv, real_segm


if __name__ == "__main__":
    key = jax.random.PRNGKey(0)

    # Case 1: B=2, C=3 RGB, 16x16 (H*W = 256, lane-aligned) -> fast path.
    fake_rgb, real_rgb, uv, real_segm = _make_inputs(key, 2, 3, 16, 16)
    loss = jax.block_until_ready(
        l2_loss_pallas(fake_rgb, real_rgb, uv, real_segm,
                       weight=1.0, intersection=False))
    ref = _l2_loss_ref(fake_rgb, real_rgb, uv, real_segm,
                       weight=1.0, intersection=False)
    assert jnp.allclose(loss, ref, rtol=5e-5, atol=1e-6), (loss, ref)

    # Case 2: intersection=True path.
    loss_i = jax.block_until_ready(
        l2_loss_pallas(fake_rgb, real_rgb, uv, real_segm,
                       weight=2.0, intersection=True))
    ref_i = _l2_loss_ref(fake_rgb, real_rgb, uv, real_segm,
                         weight=2.0, intersection=True)
    assert jnp.allclose(loss_i, ref_i, rtol=5e-5, atol=1e-6), (loss_i, ref_i)

    # Case 3: ragged H*W (10x10, not a multiple of 128) -> minimal-pad path.
    fr2, rr2, uv2, seg2 = _make_inputs(jax.random.PRNGKey(1), 2, 3, 10, 10)
    loss_p = jax.block_until_ready(
        l2_loss_pallas(fr2, rr2, uv2, seg2, weight=1.0, intersection=False))
    ref_p = _l2_loss_ref(fr2, rr2, uv2, seg2, weight=1.0, intersection=False)
    assert jnp.allclose(loss_p, ref_p, rtol=5e-5, atol=1e-6), (loss_p, ref_p)

    # Case 4: exercise the tiled + 2-way core-split path on small data by
    # forcing a small tile (64x80 -> rows=40, tile_rows=16 -> 3 tiles, odd).
    fr3, rr3, uv3, seg3 = _make_inputs(jax.random.PRNGKey(2), 2, 3, 64, 80)
    loss_t = jax.block_until_ready(
        l2_loss_pallas(fr3, rr3, uv3, seg3, weight=1.5, intersection=False,
                       max_tile_rows=16))
    ref_t = _l2_loss_ref(fr3, rr3, uv3, seg3, weight=1.5, intersection=False)
    assert jnp.allclose(loss_t, ref_t, rtol=5e-5, atol=1e-6), (loss_t, ref_t)

    print("KERNEL_OK")
</pallas_src>

<mosaic_0001>
module attributes {stable_mosaic.version = 11 : i64} {
  func.func @kernel(%arg0: i32, %arg1: memref<1x3x2x128xf32, #tpu.memory_space<vmem>>, %arg2: memref<1x3x2x128xf32, #tpu.memory_space<vmem>>, %arg3: memref<1x1x2x128xf32, #tpu.memory_space<vmem>>, %arg4: memref<1x1x2x128xf32, #tpu.memory_space<vmem>>, %arg5: memref<1x8x128xf32, #tpu.memory_space<vmem>>) attributes {dimension_semantics = [#tpu.dimension_semantics<parallel>], iteration_bounds = array<i64: 2>, scalar_prefetch = 0 : i64, scratch_operands = 0 : i64, tpu.core_type = #tpu.core_type<tc>, window_params = [{transform_indices = @transform_0, window_bounds = array<i64: 1, 3, 2, 128>}, {transform_indices = @transform_1, window_bounds = array<i64: 1, 3, 2, 128>}, {transform_indices = @transform_2, window_bounds = array<i64: 1, 1, 2, 128>}, {transform_indices = @transform_3, window_bounds = array<i64: 1, 1, 2, 128>}, {transform_indices = @transform_4, window_bounds = array<i64: 1, 8, 128>}]} {
    %c0 = arith.constant 0 : index
    %c0_0 = arith.constant 0 : index
    %c0_1 = arith.constant 0 : index
    %c0_2 = arith.constant 0 : index
    %0 = vector.load %arg3[%c0, %c0_0, %c0_1, %c0_2] : memref<1x1x2x128xf32, #tpu.memory_space<vmem>>, vector<1x1x2x128xf32>
    %c0_3 = arith.constant 0 : index
    %c0_4 = arith.constant 0 : index
    %c0_5 = arith.constant 0 : index
    %c0_6 = arith.constant 0 : index
    %1 = vector.load %arg4[%c0_3, %c0_4, %c0_5, %c0_6] : memref<1x1x2x128xf32, #tpu.memory_space<vmem>>, vector<1x1x2x128xf32>
    %cst = arith.constant -1.000000e+00 : f32
    %2 = vector.broadcast %cst : f32 to vector<1x1x2x128xf32>
    %3 = arith.cmpf ogt, %0, %2 : vector<1x1x2x128xf32>
    %4 = arith.extui %3 : vector<1x1x2x128xi1> to vector<1x1x2x128xi32>
    %5 = arith.sitofp %4 : vector<1x1x2x128xi32> to vector<1x1x2x128xf32>
    %6 = arith.addf %5, %1 : vector<1x1x2x128xf32>
    %cst_7 = arith.constant 0.000000e+00 : f32
    %cst_8 = arith.constant 1.000000e+00 : f32
    %7 = vector.broadcast %cst_7 : f32 to vector<1x1x2x128xf32>
    %8 = arith.maximumf %7, %6 : vector<1x1x2x128xf32>
    %9 = vector.broadcast %cst_8 : f32 to vector<1x1x2x128xf32>
    %10 = arith.minimumf %9, %8 : vector<1x1x2x128xf32>
    %c0_9 = arith.constant 0 : index
    %c0_10 = arith.constant 0 : index
    %c0_11 = arith.constant 0 : index
    %c0_12 = arith.constant 0 : index
    %11 = vector.load %arg2[%c0_9, %c0_10, %c0_11, %c0_12] : memref<1x3x2x128xf32, #tpu.memory_space<vmem>>, vector<1x3x2x128xf32>
    %c0_13 = arith.constant 0 : index
    %c0_14 = arith.constant 0 : index
    %c0_15 = arith.constant 0 : index
    %c0_16 = arith.constant 0 : index
    %12 = vector.load %arg1[%c0_13, %c0_14, %c0_15, %c0_16] : memref<1x3x2x128xf32, #tpu.memory_space<vmem>>, vector<1x3x2x128xf32>
    %13 = arith.subf %11, %12 : vector<1x3x2x128xf32>
    %14 = vector.broadcast %10 : vector<1x1x2x128xf32> to vector<1x3x2x128xf32>
    %15 = arith.mulf %13, %14 : vector<1x3x2x128xf32>
    %16 = arith.mulf %15, %15 : vector<1x3x2x128xf32>
    %17 = vector.shape_cast %16 : vector<1x3x2x128xf32> to vector<1x1x3x2x128xf32>
    %cst_17 = arith.constant dense<0.000000e+00> : vector<1xf32>
    %18 = vector.multi_reduction <add>, %17, %cst_17 [1, 2, 3, 4] : vector<1x1x3x2x128xf32> to vector<1xf32>
    %19 = vector.shape_cast %18 : vector<1xf32> to vector<1x1x1x1x1xf32>
    %20 = vector.extract %19[0, 0, 0, 0, 0] : f32 from vector<1x1x1x1x1xf32>
    %cst_18 = arith.constant 6.51041686E-4 : f32
    %21 = arith.mulf %20, %cst_18 : f32
    %22 = vector.broadcast %21 : f32 to vector<1x8x128xf32>
    %c0_19 = arith.constant 0 : index
    %c0_20 = arith.constant 0 : index
    %c0_21 = arith.constant 0 : index
    %23 = vector.load %arg5[%c0_19, %c0_20, %c0_21] : memref<1x8x128xf32, #tpu.memory_space<vmem>>, vector<1x8x128xf32>
    tpu.vector_store %arg5[%c0_19, %c0_20, %c0_21], %22 {strides = array<i32>} : memref<1x8x128xf32, #tpu.memory_space<vmem>>, vector<1x8x128xf32>,
    return
  }
  func.func @transform_0(%arg0: i32) -> (i32, i32, i32, i32) {
    %c0_i32 = arith.constant 0 : i32
    %c0_i32_0 = arith.constant 0 : i32
    %c0_i32_1 = arith.constant 0 : i32
    %c0_i32_2 = arith.constant 0 : i32
    return %arg0, %c0_i32, %c0_i32_0, %c0_i32_1 : i32, i32, i32, i32
  }
  func.func @transform_1(%arg0: i32) -> (i32, i32, i32, i32) {
    %c0_i32 = arith.constant 0 : i32
    %c0_i32_0 = arith.constant 0 : i32
    %c0_i32_1 = arith.constant 0 : i32
    %c0_i32_2 = arith.constant 0 : i32
    return %arg0, %c0_i32, %c0_i32_0, %c0_i32_1 : i32, i32, i32, i32
  }
  func.func @transform_2(%arg0: i32) -> (i32, i32, i32, i32) {
    %c0_i32 = arith.constant 0 : i32
    %c0_i32_0 = arith.constant 0 : i32
    %c0_i32_1 = arith.constant 0 : i32
    %c0_i32_2 = arith.constant 0 : i32
    return %arg0, %c0_i32, %c0_i32_0, %c0_i32_1 : i32, i32, i32, i32
  }
  func.func @transform_3(%arg0: i32) -> (i32, i32, i32, i32) {
    %c0_i32 = arith.constant 0 : i32
    %c0_i32_0 = arith.constant 0 : i32
    %c0_i32_1 = arith.constant 0 : i32
    %c0_i32_2 = arith.constant 0 : i32
    return %arg0, %c0_i32, %c0_i32_0, %c0_i32_1 : i32, i32, i32, i32
  }
  func.func @transform_4(%arg0: i32) -> (i32, i32, i32) {
    %c0_i32 = arith.constant 0 : i32
    %c0_i32_0 = arith.constant 0 : i32
    %c0_i32_1 = arith.constant 0 : i32
    return %arg0, %c0_i32, %c0_i32_0 : i32, i32, i32
  }
}

</mosaic_0001>

<llo_original>
// kernel: tpu_custom_call.1
$region0: #{tpu_custom_call.1}
  #allocation0 [shape = 'u32[]', space=smem, size = 0x4, offset = 0x4, fixed_abs, tag = 'smem constant byte address 0x4 - core index']
  #allocation1 [shape = 'u32[144,128]{1,0:T(1,128)}', space=vmem, size = 0x12000, scoped, tag = 'internal scratch']
  %s0 = inlined_call_operand.hbm [shape: f32[2,3,2,128], index: 0, kind: input, shape index: {}]
  %s1 = inlined_call_operand.hbm [shape: f32[2,3,2,128], index: 1, kind: input, shape index: {}]
  %s2 = inlined_call_operand.hbm [shape: f32[2,2,2,128], index: 2, kind: input, shape index: {}]
  %s3 = inlined_call_operand.hbm [shape: f32[2,1,2,128], index: 3, kind: input, shape index: {}]
  %s4 = inlined_call_operand.hbm [shape: f32[2,8,128], index: 4, kind: output, shape index: {}]
  %s5 = sld [smem:[#allocation0]]
  $region65: #{tpu_custom_call.1} parent=0
    _
  %s7 = ssub.s32 1, %s5
  %s8 = scalar_select 0, %s7, %s5
  $region1: #{tpu_custom_call.1} parent=0
    #allocation2 [shape = 'u8[6144]{0}', space=vmem, size = 0x1800, scoped, tag = 'input window, operand 0']
    #allocation3 [shape = 's32[2]{0}', space=sflag, size = 0x8, scoped, tag = 'scoped memory for tpu_custom_call.1']
    #allocation4 [shape = 's32[2]{0}', space=sflag, size = 0x8, scoped, tag = 'scoped memory for tpu_custom_call.1']
    #allocation5 [shape = 'u8[6144]{0}', space=vmem, size = 0x1800, scoped, tag = 'input window, operand 1']
    #allocation6 [shape = 's32[2]{0}', space=sflag, size = 0x8, scoped, tag = 'scoped memory for tpu_custom_call.1']
    #allocation7 [shape = 'u8[2048]{0}', space=vmem, size = 0x800, scoped, tag = 'input window, operand 2']
    #allocation8 [shape = 'u8[2048]{0}', space=vmem, size = 0x800, scoped, tag = 'input window, operand 3']
    #allocation9 [shape = 's32[2]{0}', space=sflag, size = 0x8, scoped, tag = 'scoped memory for tpu_custom_call.1']
    #allocation10 [shape = 'u8[8192]{0}', space=vmem, size = 0x2000, scoped, tag = 'output window, operand 0']
    %9 = vsyncpa [#allocation3], 0
    %s10 = scalar_lea.sflag [#allocation3], 1
    %11 = vsyncpa %s10, 0
    %12 = vsyncpa [#allocation6], 0
    %s13 = scalar_lea.sflag [#allocation6], 1
    %14 = vsyncpa %s13, 0
    %15 = vsyncpa [#allocation9], 0
    %s16 = scalar_lea.sflag [#allocation9], 1
    %17 = vsyncpa %s16, 0
    %18 = vsyncpa [#allocation4], 0
    %s19 = scalar_lea.sflag [#allocation4], 1
    %20 = vsyncpa %s19, 0
    loop: start=0, step=1, limit=4
    $region2: #{tpu_custom_call.1} parent=1 // loop_pre_header
      _
    $region3: #{tpu_custom_call.1} parent=1 // loop_header
      %s22 = sphi 0, %s26
      %p23 = scmp.ge.s32.totalorder %s22, 4
      %s32 = sphi 0, %s34
      %s35 = sphi 0, %s32
      %s36 = sphi 0, %s35
      %s52 = sphi 0, %s36
      %s58 = sphi 0, %s60
      %s61 = sphi 0, %s58
      %s62 = sphi 0, %s61
      %s78 = sphi 0, %s62
      %s84 = sphi 0, %s86
      %s87 = sphi 0, %s84
      %s88 = sphi 0, %s87
      %s104 = sphi 0, %s88
      %s110 = sphi 0, %s112
      %s113 = sphi 0, %s110
      %s114 = sphi 0, %s113
      %s130 = sphi 0, %s114
      %s136 = sphi 0, %s138
      %s139 = sphi 0, %s136
      %s140 = sphi 0, %s139
      %s156 = sphi 0, %s140
    $region4: #{tpu_custom_call.1} parent=1 // loop_header_branch
      %25 = sbr.rel (%p23) target = $region8
    $region5: #{tpu_custom_call.1} parent=1 // loop_body
      %s27 = ssub.s32 %s22, 1
      %s28 = ssub.s32 %s22, 2
      %s29 = sadd.s32 %s22, 1
      %s30 = ssub.s32 %s22, %s29
      %p31 = scmp.eq.s32.totalorder %s30, 0
      %s33 = sadd.s32 %s32, 1
      %s34 = scalar_select %p31, %s32, %s33
      %p37 = pneg %p31
      %p38 = scmp.eq.s32.totalorder %s22, 1
      %p39 = por %p37, %p38
      %p40 = scmp.ne.s32.totalorder %s32, %s35
      %p41 = scmp.eq.s32.totalorder %s22, 0
      %p42 = por %p40, %p41
      %p43 = scmp.ne.s32.totalorder %s32, %s35
      %p44 = scmp.eq.s32.totalorder %s27, 1
      %p45 = por %p43, %p44
      %p46 = scmp.ne.s32.totalorder %s35, %s36
      %p47 = scmp.eq.s32.totalorder %s27, 0
      %p48 = por %p46, %p47
      %p49 = scmp.ne.s32.totalorder %s35, %s36
      %p50 = scmp.eq.s32.totalorder %s28, 1
      %p51 = por %p49, %p50
      %p53 = scmp.ne.s32.totalorder %s36, %s52
      %p54 = scmp.eq.s32.totalorder %s28, 0
      %p55 = por %p53, %p54
      %s56 = ssub.s32 %s22, %s29
      %p57 = scmp.eq.s32.totalorder %s56, 0
      %s59 = sadd.s32 %s58, 1
      %s60 = scalar_select %p57, %s58, %s59
      %p63 = pneg %p57
      %p64 = scmp.eq.s32.totalorder %s22, 1
      %p65 = por %p63, %p64
      %p66 = scmp.ne.s32.totalorder %s58, %s61
      %p67 = scmp.eq.s32.totalorder %s22, 0
      %p68 = por %p66, %p67
      %p69 = scmp.ne.s32.totalorder %s58, %s61
      %p70 = scmp.eq.s32.totalorder %s27, 1
      %p71 = por %p69, %p70
      %p72 = scmp.ne.s32.totalorder %s61, %s62
      %p73 = scmp.eq.s32.totalorder %s27, 0
      %p74 = por %p72, %p73
      %p75 = scmp.ne.s32.totalorder %s61, %s62
      %p76 = scmp.eq.s32.totalorder %s28, 1
      %p77 = por %p75, %p76
      %p79 = scmp.ne.s32.totalorder %s62, %s78
      %p80 = scmp.eq.s32.totalorder %s28, 0
      %p81 = por %p79, %p80
      %s82 = ssub.s32 %s22, %s29
      %p83 = scmp.eq.s32.totalorder %s82, 0
      %s85 = sadd.s32 %s84, 1
      %s86 = scalar_select %p83, %s84, %s85
      %p89 = pneg %p83
      %p90 = scmp.eq.s32.totalorder %s22, 1
      %p91 = por %p89, %p90
      %p92 = scmp.ne.s32.totalorder %s84, %s87
      %p93 = scmp.eq.s32.totalorder %s22, 0
      %p94 = por %p92, %p93
      %p95 = scmp.ne.s32.totalorder %s84, %s87
      %p96 = scmp.eq.s32.totalorder %s27, 1
      %p97 = por %p95, %p96
      %p98 = scmp.ne.s32.totalorder %s87, %s88
      %p99 = scmp.eq.s32.totalorder %s27, 0
      %p100 = por %p98, %p99
      %p101 = scmp.ne.s32.totalorder %s87, %s88
      %p102 = scmp.eq.s32.totalorder %s28, 1
      %p103 = por %p101, %p102
      %p105 = scmp.ne.s32.totalorder %s88, %s104
      %p106 = scmp.eq.s32.totalorder %s28, 0
      %p107 = por %p105, %p106
      %s108 = ssub.s32 %s22, %s29
      %p109 = scmp.eq.s32.totalorder %s108, 0
      %s111 = sadd.s32 %s110, 1
      %s112 = scalar_select %p109, %s110, %s111
      %p115 = pneg %p109
      %p116 = scmp.eq.s32.totalorder %s22, 1
      %p117 = por %p115, %p116
      %p118 = scmp.ne.s32.totalorder %s110, %s113
      %p119 = scmp.eq.s32.totalorder %s22, 0
      %p120 = por %p118, %p119
      %p121 = scmp.ne.s32.totalorder %s110, %s113
      %p122 = scmp.eq.s32.totalorder %s27, 1
      %p123 = por %p121, %p122
      %p124 = scmp.ne.s32.totalorder %s113, %s114
      %p125 = scmp.eq.s32.totalorder %s27, 0
      %p126 = por %p124, %p125
      %p127 = scmp.ne.s32.totalorder %s113, %s114
      %p128 = scmp.eq.s32.totalorder %s28, 1
      %p129 = por %p127, %p128
      %p131 = scmp.ne.s32.totalorder %s114, %s130
      %p132 = scmp.eq.s32.totalorder %s28, 0
      %p133 = por %p131, %p132
      %s134 = ssub.s32 %s22, %s29
      %p135 = scmp.eq.s32.totalorder %s134, 0
      %s137 = sadd.s32 %s136, 1
      %s138 = scalar_select %p135, %s136, %s137
      %p141 = pneg %p135
      %p142 = scmp.eq.s32.totalorder %s22, 1
      %p143 = por %p141, %p142
      %p144 = scmp.ne.s32.totalorder %s136, %s139
      %p145 = scmp.eq.s32.totalorder %s22, 0
      %p146 = por %p144, %p145
      %p147 = scmp.ne.s32.totalorder %s136, %s139
      %p148 = scmp.eq.s32.totalorder %s27, 1
      %p149 = por %p147, %p148
      %p150 = scmp.ne.s32.totalorder %s139, %s140
      %p151 = scmp.eq.s32.totalorder %s27, 0
      %p152 = por %p150, %p151
      %p153 = scmp.ne.s32.totalorder %s139, %s140
      %p154 = scmp.eq.s32.totalorder %s28, 1
      %p155 = por %p153, %p154
      %p157 = scmp.ne.s32.totalorder %s140, %s156
      %p158 = scmp.eq.s32.totalorder %s28, 0
      %p159 = por %p157, %p158
      %p160 = scmp.le.s32.totalorder 1, %s22
      %p161 = scmp.lt.s32.totalorder %s22, 3
      %p162 = pnand %p160, %p161
      %p163 = pneg %p162
      // Predicated region
      $region9: #{tpu_custom_call.1} parent=5 // pred_check
        _
      $region10: #{tpu_custom_call.1} parent=5 // pred_check_branch
        %165 = sbr.rel (%p162) target = $region12
      $region11: #{tpu_custom_call.1} parent=5 // pred_region
        %s166 = ssub.s32 %s22, 1
      $region12: #{tpu_custom_call.1} parent=5 // pred_fallthru
        _
      %p167 = scmp.lt.s32.totalorder %s22, 2
      // Predicated region
      $region13: #{tpu_custom_call.1} parent=5 // pred_check
        %p168 = pneg %p167
      $region14: #{tpu_custom_call.1} parent=5 // pred_check_branch
        %170 = sbr.rel (%p168) target = $region16
      $region15: #{tpu_custom_call.1} parent=5 // pred_region
        // Predicated region
        $region17: #{tpu_custom_call.1} parent=15 // pred_check
          %p171 = pneg %p42
        $region18: #{tpu_custom_call.1} parent=15 // pred_check_branch
          %173 = sbr.rel (%p171) target = $region20
        $region19: #{tpu_custom_call.1} parent=15 // pred_region
          %s174 = sand.u32 %s32, 1
          %s175 = scalar_lea.sflag [#allocation3], %s174
          %s176 = sand.u32 %s32, 1
          %s177 = smul.addr %s176, 6
          %s178 = scalar_lea.vmem [#allocation2], %s177
          %s180 = ssub.s32 96, 96
          %181 = vsyncadd %s175, %s180
          %s182 = smul.addr %s22, 3
          %s183 = smul.addr %s182, 32
          %s184 = scalar_lea.hbm %s0, %s183
          %s185 = sshll.u32 %s178, 4
          %s186 = int_to_ptr.vmem [resolvable:$true] %s185
          %191 = dma.hbm_to_vmem [thread:$0]  %s184, 96, %s186, %s175, 32, 32, 2
        $region20: #{tpu_custom_call.1} parent=15 // pred_fallthru
          _
        // Predicated region
        $region21: #{tpu_custom_call.1} parent=15 // pred_check
          %p192 = pneg %p68
        $region22: #{tpu_custom_call.1} parent=15 // pred_check_branch
          %194 = sbr.rel (%p192) target = $region24
        $region23: #{tpu_custom_call.1} parent=15 // pred_region
          %s195 = sand.u32 %s22, 1
          %s196 = scalar_lea.sflag [#allocation6], %s195
          %s197 = sand.u32 %s58, 1
          %s198 = smul.addr %s197, 6
          %s199 = scalar_lea.vmem [#allocation5], %s198
          %s201 = ssub.s32 96, 96
          %202 = vsyncadd %s196, %s201
          %s203 = smul.addr %s22, 3
          %s204 = smul.addr %s203, 32
          %s205 = scalar_lea.hbm %s1, %s204
          %s206 = sshll.u32 %s199, 4
          %s207 = int_to_ptr.vmem [resolvable:$true] %s206
          %212 = dma.hbm_to_vmem [thread:$0]  %s205, 96, %s207, %s196, 32, 32, 2
        $region24: #{tpu_custom_call.1} parent=15 // pred_fallthru
          _
        // Predicated region
        $region25: #{tpu_custom_call.1} parent=15 // pred_check
          %p213 = pneg %p94
        $region26: #{tpu_custom_call.1} parent=15 // pred_check_branch
          %215 = sbr.rel (%p213) target = $region28
        $region27: #{tpu_custom_call.1} parent=15 // pred_region
          %s216 = sand.u32 %s22, 1
          %s217 = scalar_lea.sflag [#allocation6], %s216
          %s218 = sand.u32 %s84, 1
          %s219 = smul.addr %s218, 2
          %s220 = scalar_lea.vmem [#allocation7], %s219
          %s222 = ssub.s32 32, 32
          %223 = vsyncadd %s217, %s222
          %s224 = smul.addr %s22, 2
          %s225 = smul.addr %s224, 32
          %s226 = scalar_lea.hbm %s2, %s225
          %s228 = sshll.u32 %s220, 4
          %s229 = int_to_ptr.vmem [resolvable:$true] %s228
          %231 = dma.hbm_to_vmem [thread:$0]  %s226, 32, %s229, %s217
        $region28: #{tpu_custom_call.1} parent=15 // pred_fallthru
          _
        // Predicated region
        $region29: #{tpu_custom_call.1} parent=15 // pred_check
          %p232 = pneg %p120
        $region30: #{tpu_custom_call.1} parent=15 // pred_check_branch
          %234 = sbr.rel (%p232) target = $region32
        $region31: #{tpu_custom_call.1} parent=15 // pred_region
          %s235 = sand.u32 %s110, 1
          %s236 = scalar_lea.sflag [#allocation9], %s235
          %s237 = sand.u32 %s110, 1
          %s238 = smul.addr %s237, 2
          %s239 = scalar_lea.vmem [#allocation8], %s238
          %s241 = ssub.s32 32, 32
          %242 = vsyncadd %s236, %s241
          %s243 = smul.addr %s22, 32
          %s244 = scalar_lea.hbm %s3, %s243
          %s246 = sshll.u32 %s239, 4
          %s247 = int_to_ptr.vmem [resolvable:$true] %s246
          %249 = dma.hbm_to_vmem [thread:$0]  %s244, 32, %s247, %s236
        $region32: #{tpu_custom_call.1} parent=15 // pred_fallthru
          _
      $region16: #{tpu_custom_call.1} parent=5 // pred_fallthru
        _
      %p250 = scmp.le.s32.totalorder 1, %s22
      %p251 = scmp.lt.s32.totalorder %s22, 3
      %p252 = pnand %p250, %p251
      %p253 = pneg %p252
      // Predicated region
      $region33: #{tpu_custom_call.1} parent=5 // pred_check
        _
      $region34: #{tpu_custom_call.1} parent=5 // pred_check_branch
        %255 = sbr.rel (%p252) target = $region36
      $region35: #{tpu_custom_call.1} parent=5 // pred_region
        %s256 = ssub.s32 %s22, 1
        %s257 = sand.u32 %s35, 1
        %s258 = scalar_lea.sflag [#allocation3], %s257
        %s259 = sand.u32 %s35, 1
        %s260 = smul.addr %s259, 6
        %s261 = scalar_lea.vmem [#allocation2], %s260
        // Predicated region
        $region37: #{tpu_custom_call.1} parent=35 // pred_check
          %p262 = pneg %p48
        $region38: #{tpu_custom_call.1} parent=35 // pred_check_branch
          %264 = sbr.rel (%p262) target = $region40
        $region39: #{tpu_custom_call.1} parent=35 // pred_region
          %265 = dma.done %s258, 96
        $region40: #{tpu_custom_call.1} parent=35 // pred_fallthru
          _
        %s266 = sand.u32 %s27, 1
        %s267 = scalar_lea.sflag [#allocation6], %s266
        %s268 = sand.u32 %s61, 1
        %s269 = smul.addr %s268, 6
        %s270 = scalar_lea.vmem [#allocation5], %s269
        // Predicated region
        $region41: #{tpu_custom_call.1} parent=35 // pred_check
          %p271 = pneg %p74
        $region42: #{tpu_custom_call.1} parent=35 // pred_check_branch
          %273 = sbr.rel (%p271) target = $region44
        $region43: #{tpu_custom_call.1} parent=35 // pred_region
          %274 = dma.done %s267, 96
        $region44: #{tpu_custom_call.1} parent=35 // pred_fallthru
          _
        %s275 = sand.u32 %s27, 1
        %s276 = scalar_lea.sflag [#allocation6], %s275
        %s277 = sand.u32 %s87, 1
        %s278 = smul.addr %s277, 2
        %s279 = scalar_lea.vmem [#allocation7], %s278
        // Predicated region
        $region45: #{tpu_custom_call.1} parent=35 // pred_check
          %p280 = pneg %p100
        $region46: #{tpu_custom_call.1} parent=35 // pred_check_branch
          %282 = sbr.rel (%p280) target = $region48
        $region47: #{tpu_custom_call.1} parent=35 // pred_region
          %283 = dma.done %s276, 32
        $region48: #{tpu_custom_call.1} parent=35 // pred_fallthru
          _
        %s284 = sand.u32 %s113, 1
        %s285 = scalar_lea.sflag [#allocation9], %s284
        %s286 = sand.u32 %s113, 1
        %s287 = smul.addr %s286, 2
        %s288 = scalar_lea.vmem [#allocation8], %s287
        // Predicated region
        $region49: #{tpu_custom_call.1} parent=35 // pred_check
          %p289 = pneg %p126
        $region50: #{tpu_custom_call.1} parent=35 // pred_check_branch
          %291 = sbr.rel (%p289) target = $region52
        $region51: #{tpu_custom_call.1} parent=35 // pred_region
          %292 = dma.done %s285, 32
        $region52: #{tpu_custom_call.1} parent=35 // pred_fallthru
          _
        %s293 = sand.u32 %s35, 1
        %s294 = scalar_lea.sflag [#allocation3], %s293
        %s295 = sand.u32 %s35, 1
        %s296 = smul.addr %s295, 6
        %s297 = scalar_lea.vmem [#allocation2], %s296
        %p298 = pneg %p48
        %p299 = pneg %p45
        %s300 = sand.u32 %s27, 1
        %s301 = scalar_lea.sflag [#allocation6], %s300
        %s302 = sand.u32 %s61, 1
        %s303 = smul.addr %s302, 6
        %s304 = scalar_lea.vmem [#allocation5], %s303
        %p305 = pneg %p74
        %p306 = pneg %p71
        %s307 = sand.u32 %s27, 1
        %s308 = scalar_lea.sflag [#allocation6], %s307
        %s309 = sand.u32 %s87, 1
        %s310 = smul.addr %s309, 2
        %s311 = scalar_lea.vmem [#allocation7], %s310
        %p312 = pneg %p100
        %p313 = pneg %p97
        %s314 = sand.u32 %s113, 1
        %s315 = scalar_lea.sflag [#allocation9], %s314
        %s316 = sand.u32 %s113, 1
        %s317 = smul.addr %s316, 2
        %s318 = scalar_lea.vmem [#allocation8], %s317
        %p319 = pneg %p126
        %p320 = pneg %p123
        %p321 = pneg %p152
        %p322 = pneg %p149
        %s323 = sand.u32 %s139, 1
        %s324 = scalar_lea.sflag [#allocation4], %s323
        %s325 = sand.u32 %s139, 1
        %s326 = smul.addr %s325, 8
        %s327 = scalar_lea.vmem [#allocation10], %s326
        %v328 = vld [vmem:[%s279] sm:$0x3]
        %v329 = vld [vmem:[%s288] sm:$0x3]
        %vm330 = vcmp.gt.f32.partialorder %v328, -1.0
        %v331 = vsel %vm330, 1, 0
        %v332 = vcvt.s32.f32 %v331
        %v333 = vadd.f32 %v332, %v329
        %v334 = vmax.f32 %v333, 0.0
        %v335 = vmin.f32 %v334, 1.0
        %v336 = vld [vmem:[%s270] sm:$0x3]
        %v337 = vld [vmem:[%s270 + $0x2] sm:$0x3]
        %v338 = vld [vmem:[%s270 + $0x4] sm:$0x3]
        %v339 = vld [vmem:[%s261] sm:$0x3]
        %v340 = vld [vmem:[%s261 + $0x2] sm:$0x3]
        %v341 = vld [vmem:[%s261 + $0x4] sm:$0x3]
        %v342 = vsub.f32 %v336, %v339
        %v343 = vsub.f32 %v337, %v340
        %v344 = vsub.f32 %v338, %v341
        %v345 = vmul.f32 %v342, %v335
        %v346 = vmul.f32 %v343, %v335
        %v347 = vmul.f32 %v344, %v335
        %v348 = vmul.f32 %v345, %v345
        %v349 = vmul.f32 %v346, %v346
        %v350 = vmul.f32 %v347, %v347
        %vm351 = vcmask 1041408
        %v352 = vsel %vm351, %v348, 0.0
        %v353 = vsel %vm351, %v349, 0.0
        %v354 = vadd.f32 %v352, %v353
        %v355 = vsel %vm351, %v350, 0.0
        %v356 = vadd.f32 %v354, %v355
        %357 = vadd.xlane.f32.xlu0 %v356
        %v358 = vpop.xlane.xlu0 %357
        %v359 = vrot.slane %v358, 4
        %v360 = vadd.f32 %v358, %v359
        %v361 = vrot.slane %v360, 2
        %v362 = vadd.f32 %v360, %v361
        %v363 = vrot.slane %v362, 1
        %v364 = vadd.f32 %v362, %v363
        %s365 = vtos %v364
        %s366 = smul.f32 %s365, 0.0006510417
        %v367 = vstv %s366
        %368 = vst [vmem:[%s327] sm:$0xff] %v367
        %s369 = sand.u32 %s139, 1
        %s370 = scalar_lea.sflag [#allocation4], %s369
        %s371 = sand.u32 %s139, 1
        %s372 = smul.addr %s371, 8
        %s373 = scalar_lea.vmem [#allocation10], %s372
        // Predicated region
        $region53: #{tpu_custom_call.1} parent=35 // pred_check
          %p374 = pneg %p149
        $region54: #{tpu_custom_call.1} parent=35 // pred_check_branch
          %376 = sbr.rel (%p374) target = $region56
        $region55: #{tpu_custom_call.1} parent=35 // pred_region
          %s378 = ssub.s32 128, 128
          %379 = vsyncadd %s370, %s378
          %s380 = smul.addr %s27, 128
          %s381 = scalar_lea.hbm %s4, %s380
          %s383 = sshll.u32 %s373, 4
          %s384 = int_to_ptr.vmem [resolvable:$true] %s383
          %386 = dma.vmem_to_hbm [thread:$0]  %s384, 128, %s381, %s370
        $region56: #{tpu_custom_call.1} parent=35 // pred_fallthru
          _
      $region36: #{tpu_custom_call.1} parent=5 // pred_fallthru
        _
      %p387 = scmp.le.s32.totalorder 2, %s22
      // Predicated region
      $region57: #{tpu_custom_call.1} parent=5 // pred_check
        %p388 = pneg %p387
      $region58: #{tpu_custom_call.1} parent=5 // pred_check_branch
        %390 = sbr.rel (%p388) target = $region60
      $region59: #{tpu_custom_call.1} parent=5 // pred_region
        %s391 = ssub.s32 %s22, 2
        // Predicated region
        $region61: #{tpu_custom_call.1} parent=59 // pred_check
          %p392 = pneg %p155
        $region62: #{tpu_custom_call.1} parent=59 // pred_check_branch
          %394 = sbr.rel (%p392) target = $region64
        $region63: #{tpu_custom_call.1} parent=59 // pred_region
          %s395 = sand.u32 %s140, 1
          %s396 = scalar_lea.sflag [#allocation4], %s395
          %s397 = sand.u32 %s140, 1
          %s398 = smul.addr %s397, 8
          %s399 = scalar_lea.vmem [#allocation10], %s398
          %400 = dma.done %s396, 128
        $region64: #{tpu_custom_call.1} parent=59 // pred_fallthru
          _
      $region60: #{tpu_custom_call.1} parent=5 // pred_fallthru
        _
    $region6: #{tpu_custom_call.1} parent=1 // loop_footer
      %s26 = sadd.s32 1, %s22
    $region7: #{tpu_custom_call.1} parent=1 // loop_footer_branch
      %21 = sbr.rel target = $region3
    $region8: #{tpu_custom_call.1} parent=1 // loop_exit
      _
    %401 = vsyncpa [#allocation3], 1
    %s402 = scalar_lea.sflag [#allocation3], 1
    %403 = vsyncpa %s402, 1
    %404 = vsyncpa [#allocation6], 1
    %s405 = scalar_lea.sflag [#allocation6], 1
    %406 = vsyncpa %s405, 1
    %407 = vsyncpa [#allocation9], 1
    %s408 = scalar_lea.sflag [#allocation9], 1
    %409 = vsyncpa %s408, 1
    %410 = vsyncpa [#allocation4], 1
    %s411 = scalar_lea.sflag [#allocation4], 1
    %412 = vsyncpa %s411, 1

</llo_original>
